<compile_context>
chip_gen: v7x
topology: tpu7x:2x2x1
jax: 0.10.0
libtpu: 0.0.40
codegen_flags: <defaults>
</compile_context>

<pallas_src>
import math

import jax
import jax.numpy as jnp
from jax import lax
from jax.experimental import pallas as pl
from jax.experimental.pallas import tpu as pltpu


_CHUNK = 8  # timesteps per recurrence chunk


def _round_up(x, m):
    return (x + m - 1) // m * m


def _make_ssm_kernel(Bt, Lt, I, S_pad, O_pad, true_length, need_mask,
                     n_chunks, chunk_unroll):
    """Builds the kernel body closed over static tile parameters."""

    def kernel(u_ref, bpk_ref, cpk_ref, are_ref, aim_ref,
               x0re_ref, x0im_ref,
               y_ref, xTre_ref, xTim_ref):
        l = pl.program_id(1)

        # Running state lives in the resident xT output blocks (constant
        # index_map along the sequential length axis).  Seed from x0 at l==0.
        @pl.when(l == 0)
        def _():
            xTre_ref[...] = x0re_ref[...]
            xTim_ref[...] = x0im_ref[...]

        # Hoisted resident weights / broadcasts (JAX does not CSE
        # broadcast_in_dim inside loops).
        b_pk = bpk_ref[...]                                   # (I, 2*S_pad) bf16
        c_pk = cpk_ref[...]                                   # (2*S_pad, O_pad) bf16
        a_re = jnp.broadcast_to(are_ref[...], (Bt, S_pad))
        a_im = jnp.broadcast_to(aim_ref[...], (Bt, S_pad))

        def chunk_body_fn(masked):
            def chunk_body(c, carry):
                xre, xim = carry
                base = pl.multiple_of(c * _CHUNK, _CHUNK)

                # uB for this chunk: one small MXU matmul, lane-packed re|im.
                # (With unroll=2 it overlaps the previous chunk's recurrence.)
                u_slab = u_ref[pl.ds(base, _CHUNK), :, :].reshape(_CHUNK * Bt, I)
                ub = jnp.dot(u_slab, b_pk, preferred_element_type=jnp.float32
                             ).reshape(_CHUNK, Bt, 2 * S_pad)

                # Serial complex diagonal recurrence, unrolled _CHUNK steps.
                # Time-major: each step's uB is a slow-axis slice, no shuffles.
                xs = []
                for j in range(_CHUNK):
                    if masked:
                        # Padded timesteps (last tile only): uB is already 0
                        # (host-side zero padding); force A := 1 so the carried
                        # state passes through unchanged.
                        valid = (l * Lt + base + j) < true_length
                        aj_re = jnp.where(valid, a_re, 1.0)
                        aj_im = jnp.where(valid, a_im, 0.0)
                    else:
                        aj_re, aj_im = a_re, a_im
                    new_re = aj_re * xre - aj_im * xim + ub[j, :, :S_pad]
                    new_im = aj_re * xim + aj_im * xre + ub[j, :, S_pad:]
                    xs.append(jnp.concatenate([new_re, new_im],
                                               axis=-1).astype(jnp.bfloat16))
                    xre, xim = new_re, new_im

                # Interleaved per-chunk y projection:
                #   y = real(x @ C) = [x_re | x_im] @ [C_re; -C_im]
                # One K=2*S_pad MXU matmul, lane-dense store to the time-major
                # y block (O_pad multiple of 128).
                x_pk = jnp.concatenate(xs, axis=0)            # (_CHUNK*Bt, 2*S_pad)
                y_chunk = jnp.dot(x_pk, c_pk,
                                  preferred_element_type=jnp.float32)
                y_ref[pl.ds(base, _CHUNK), :, :] = (
                    y_chunk.reshape(_CHUNK, Bt, O_pad).astype(y_ref.dtype))
                return xre, xim
            return chunk_body

        def run(masked):
            xre, xim = lax.fori_loop(0, n_chunks, chunk_body_fn(masked),
                                     (xTre_ref[...], xTim_ref[...]),
                                     unroll=chunk_unroll)
            xTre_ref[...] = xre
            xTim_ref[...] = xim

        if need_mask:
            last = pl.num_programs(1) - 1

            @pl.when(l != last)       # hot path: no per-step selects
            def _():
                run(False)

            @pl.when(l == last)       # only the final length tile masks
            def _():
                run(True)
        else:
            run(False)

    return kernel


def complex_ssm_forward(u, A, B, C, x0=None):
    """u: [batch, length, input] f32; A: [S] c64; B: [I,S] c64; C: [S,O] c64;
    x0: optional [batch, S] c64.  Returns (y f32, x_T c64)."""
    batch, length, input_size = u.shape
    state_size = A.shape[0]
    output_size = C.shape[1]
    if x0 is None:
        x0 = jnp.zeros((batch, state_size), dtype=jnp.complex64)

    f32, bf16 = jnp.float32, jnp.bfloat16

    # ---- tile sizes / padded shapes ------------------------------------------
    S_pad = _round_up(max(state_size, 128), 128)
    O_pad = _round_up(max(output_size, 128), 128)
    Lt = min(256, _round_up(length, _CHUNK))      # length tile (time-major, slow axis)
    L_pad = _round_up(length, Lt)
    # Batch tile 16-32 gives the serial recurrence 2-4 independent state vregs
    # per plane (fills the VALU slots).  Must be a multiple of 8 (sublane dim).
    Bt = min(32, _round_up(batch, 8))
    B_pad = _round_up(batch, Bt)
    need_mask = (L_pad != length)
    n_chunks = Lt // _CHUNK
    chunk_unroll = 2 if n_chunks >= 2 else 1

    # ---- host-side staging ----------------------------------------------------
    # Time-major u: [L, B, I] so the per-step state is a slow-axis slice.
    u_t = jnp.transpose(u.astype(bf16), (1, 0, 2))
    u_p = jnp.pad(u_t, ((0, L_pad - length), (0, B_pad - batch), (0, 0)))

    # Lane-packed complex weights for K=2*S_pad MXU matmuls:
    #   uB = u @ [B_re | B_im];   y = [x_re | x_im] @ [C_re; -C_im]
    B_re = jnp.pad(jnp.real(B).astype(bf16), ((0, 0), (0, S_pad - state_size)))
    B_im = jnp.pad(jnp.imag(B).astype(bf16), ((0, 0), (0, S_pad - state_size)))
    B_pk = jnp.concatenate([B_re, B_im], axis=1)              # (I, 2*S_pad)
    C_re = jnp.pad(jnp.real(C).astype(bf16),
                   ((0, S_pad - state_size), (0, O_pad - output_size)))
    C_im = jnp.pad(jnp.imag(C).astype(bf16),
                   ((0, S_pad - state_size), (0, O_pad - output_size)))
    C_pk = jnp.concatenate([C_re, -C_im], axis=0)             # (2*S_pad, O_pad)

    A_re = jnp.pad(jnp.real(A).astype(f32),
                   (0, S_pad - state_size)).reshape(1, S_pad)
    A_im = jnp.pad(jnp.imag(A).astype(f32),
                   (0, S_pad - state_size)).reshape(1, S_pad)
    x0_re = jnp.pad(jnp.real(x0).astype(f32),
                    ((0, B_pad - batch), (0, S_pad - state_size)))
    x0_im = jnp.pad(jnp.imag(x0).astype(f32),
                    ((0, B_pad - batch), (0, S_pad - state_size)))

    grid = (B_pad // Bt, L_pad // Lt)
    kernel = _make_ssm_kernel(Bt, Lt, input_size, S_pad, O_pad, length,
                              need_mask, n_chunks, chunk_unroll)

    # Per-tile footprint (no scratch; double-buffered blocks) + margin, capped
    # below the v7x 64 MiB physical VMEM.
    blk_bytes = 2 * (Lt * Bt * input_size * 2        # u (bf16)
                     + Lt * Bt * O_pad * 2           # y (bf16)
                     + input_size * 2 * S_pad * 2    # B packed
                     + 2 * S_pad * O_pad * 2         # C packed
                     + 8 * Bt * S_pad * 4)           # x0/xT/A blocks
    vmem_limit = min(48 * 1024 * 1024, max(32 * 1024 * 1024, 2 * blk_bytes))

    out_shape = (
        jax.ShapeDtypeStruct((L_pad, B_pad, O_pad), bf16),    # y, time-major
        jax.ShapeDtypeStruct((B_pad, S_pad), f32),            # xT_re
        jax.ShapeDtypeStruct((B_pad, S_pad), f32),            # xT_im
    )

    y_p, xT_re, xT_im = pl.pallas_call(
        kernel,
        out_shape=out_shape,
        grid_spec=pltpu.PrefetchScalarGridSpec(
            num_scalar_prefetch=0,
            grid=grid,
            in_specs=[
                pl.BlockSpec((Lt, Bt, input_size), lambda b, l: (l, b, 0)),   # u
                pl.BlockSpec((input_size, 2 * S_pad), lambda b, l: (0, 0)),   # [B_re|B_im]
                pl.BlockSpec((2 * S_pad, O_pad), lambda b, l: (0, 0)),        # [C_re;-C_im]
                pl.BlockSpec((1, S_pad), lambda b, l: (0, 0)),                # A_re
                pl.BlockSpec((1, S_pad), lambda b, l: (0, 0)),                # A_im
                pl.BlockSpec((Bt, S_pad), lambda b, l: (b, 0)),               # x0_re
                pl.BlockSpec((Bt, S_pad), lambda b, l: (b, 0)),               # x0_im
            ],
            out_specs=(
                pl.BlockSpec((Lt, Bt, O_pad), lambda b, l: (l, b, 0)),        # y
                pl.BlockSpec((Bt, S_pad), lambda b, l: (b, 0)),               # xT_re (resident)
                pl.BlockSpec((Bt, S_pad), lambda b, l: (b, 0)),               # xT_im (resident)
            ),
        ),
        compiler_params=pltpu.CompilerParams(
            dimension_semantics=("parallel", "arbitrary"),
            vmem_limit_bytes=vmem_limit,
        ),
    )(u_p, B_pk, C_pk, A_re, A_im, x0_re, x0_im)

    y = jnp.transpose(y_p[:length, :batch, :output_size].astype(f32), (1, 0, 2))
    xT = (xT_re[:batch, :state_size]
          + 1j * xT_im[:batch, :state_size]).astype(jnp.complex64)
    return y, xT


def init_params(key, input_size, state_size, output_size):
    """Deterministic synthetic init mirroring the module's __init__ shapes."""
    k1, k2r, k2i, k3r, k3i = jax.random.split(key, 5)
    ang = 2.0 * jnp.pi * jax.random.uniform(k1, (state_size,), dtype=jnp.float32)
    A = (jnp.cos(ang) + 1j * jnp.sin(ang)).astype(jnp.complex64)
    sB = 1.0 / math.sqrt(state_size + input_size)
    B = ((jax.random.normal(k2r, (input_size, state_size))
          + 1j * jax.random.normal(k2i, (input_size, state_size))) * sB
         ).astype(jnp.complex64)
    sC = 1.0 / math.sqrt(state_size + output_size)
    C = ((jax.random.normal(k3r, (state_size, output_size))
          + 1j * jax.random.normal(k3i, (state_size, output_size))) * sC
         ).astype(jnp.complex64)
    return A, B, C


def ref_forward(u, A, B, C, x0):
    """Pure-JAX f32/c64 reference (linear recurrence == fast_conv_complex)."""
    uB = u.astype(jnp.complex64) @ B                      # [B, L, S]

    def step(x, ub_t):
        x_new = A[None, :] * x + ub_t
        return x_new, x_new

    xT, xs = lax.scan(step, x0, jnp.swapaxes(uB, 0, 1))
    x = jnp.swapaxes(xs, 0, 1)                            # [B, L, S]
    y = jnp.real(x @ C)
    return y, x[:, -1]


def _run_case(batch, length, input_size, state_size, output_size,
              seed, atol, rtol):
    key = jax.random.fold_in(jax.random.PRNGKey(0), seed)
    kp, ku, kx0r, kx0i = jax.random.split(key, 4)
    A, B, C = init_params(kp, input_size, state_size, output_size)
    u = jax.random.normal(ku, (batch, length, input_size), dtype=jnp.float32)
    x0 = (jax.random.normal(kx0r, (batch, state_size))
          + 1j * jax.random.normal(kx0i, (batch, state_size))
          ).astype(jnp.complex64)

    y, xT = complex_ssm_forward(u, A, B, C, x0)
    jax.block_until_ready((y, xT))

    y_ref, xT_ref = ref_forward(u, A, B, C, x0)
    assert y.shape == (batch, length, output_size) and y.dtype == jnp.float32
    assert xT.shape == (batch, state_size) and xT.dtype == jnp.complex64
    # Tolerances account for bf16 MXU operands and bf16 y staging; the
    # recurrence itself accumulates in f32.
    assert jnp.allclose(y, y_ref, atol=atol, rtol=rtol), (
        "y mismatch, max abs err = %g" % float(jnp.max(jnp.abs(y - y_ref))))
    assert jnp.allclose(xT, xT_ref, atol=atol, rtol=rtol), (
        "xT mismatch, max abs err = %g" % float(jnp.max(jnp.abs(xT - xT_ref))))


if __name__ == "__main__":
    # Small canonical shapes (single tile, single chunk).
    _run_case(batch=2, length=8, input_size=4, state_size=32, output_size=4,
              seed=0, atol=5e-2, rtol=5e-2)
    # Exercises the larger batch tile and many chunks in one length tile.
    _run_case(batch=9, length=200, input_size=4, state_size=32, output_size=4,
              seed=1, atol=1.5e-1, rtol=5e-2)
    # Exercises cross-tile state carry along the length grid axis and the
    # masked (padded-timestep) last tile.
    _run_case(batch=3, length=300, input_size=4, state_size=32, output_size=4,
              seed=2, atol=2e-1, rtol=5e-2)

    print("KERNEL_OK")
</pallas_src>

<mosaic_0001>
module attributes {stable_mosaic.version = 11 : i64} {
  func.func @kernel(%arg0: i32, %arg1: i32, %arg2: memref<8x8x4xbf16, #tpu.memory_space<vmem>>, %arg3: memref<4x256xbf16, #tpu.memory_space<vmem>>, %arg4: memref<256x128xbf16, #tpu.memory_space<vmem>>, %arg5: memref<1x128xf32, #tpu.memory_space<vmem>>, %arg6: memref<1x128xf32, #tpu.memory_space<vmem>>, %arg7: memref<8x128xf32, #tpu.memory_space<vmem>>, %arg8: memref<8x128xf32, #tpu.memory_space<vmem>>, %arg9: memref<8x8x128xbf16, #tpu.memory_space<vmem>>, %arg10: memref<8x128xf32, #tpu.memory_space<vmem>>, %arg11: memref<8x128xf32, #tpu.memory_space<vmem>>) attributes {dimension_semantics = [#tpu.dimension_semantics<parallel>, #tpu.dimension_semantics<arbitrary>], iteration_bounds = array<i64: 1, 1>, scalar_prefetch = 0 : i64, scratch_operands = 0 : i64, tpu.core_type = #tpu.core_type<tc>, window_params = [{transform_indices = @transform_0, window_bounds = array<i64: 8, 8, 4>}, {pipeline_mode = #tpu.pipeline_mode<synchronous>, transform_indices = @transform_1, window_bounds = array<i64: 4, 256>}, {pipeline_mode = #tpu.pipeline_mode<synchronous>, transform_indices = @transform_2, window_bounds = array<i64: 256, 128>}, {pipeline_mode = #tpu.pipeline_mode<synchronous>, transform_indices = @transform_3, window_bounds = array<i64: 1, 128>}, {pipeline_mode = #tpu.pipeline_mode<synchronous>, transform_indices = @transform_4, window_bounds = array<i64: 1, 128>}, {transform_indices = @transform_5, window_bounds = array<i64: 8, 128>}, {transform_indices = @transform_6, window_bounds = array<i64: 8, 128>}, {transform_indices = @transform_7, window_bounds = array<i64: 8, 8, 128>}, {transform_indices = @transform_8, window_bounds = array<i64: 8, 128>}, {transform_indices = @transform_9, window_bounds = array<i64: 8, 128>}]} {
    %c0_i32 = arith.constant 0 : i32
    %0 = arith.cmpi eq, %arg1, %c0_i32 : i32
    %1 = arith.extui %0 : i1 to i32
    %c0_i32_0 = arith.constant 0 : i32
    %2 = arith.cmpi ne, %1, %c0_i32_0 : i32
    scf.if %2 {
      %c0_22 = arith.constant 0 : index
      %c0_23 = arith.constant 0 : index
      %140 = vector.load %arg7[%c0_22, %c0_23] : memref<8x128xf32, #tpu.memory_space<vmem>>, vector<8x128xf32>
      %c0_24 = arith.constant 0 : index
      %c0_25 = arith.constant 0 : index
      %141 = vector.load %arg10[%c0_24, %c0_25] : memref<8x128xf32, #tpu.memory_space<vmem>>, vector<8x128xf32>
      tpu.vector_store %arg10[%c0_24, %c0_25], %140 {strides = array<i32>} : memref<8x128xf32, #tpu.memory_space<vmem>>, vector<8x128xf32>,
      %c0_26 = arith.constant 0 : index
      %c0_27 = arith.constant 0 : index
      %142 = vector.load %arg8[%c0_26, %c0_27] : memref<8x128xf32, #tpu.memory_space<vmem>>, vector<8x128xf32>
      %c0_28 = arith.constant 0 : index
      %c0_29 = arith.constant 0 : index
      %143 = vector.load %arg11[%c0_28, %c0_29] : memref<8x128xf32, #tpu.memory_space<vmem>>, vector<8x128xf32>
      tpu.vector_store %arg11[%c0_28, %c0_29], %142 {strides = array<i32>} : memref<8x128xf32, #tpu.memory_space<vmem>>, vector<8x128xf32>,
    } else {
    }
    %c0 = arith.constant 0 : index
    %c0_1 = arith.constant 0 : index
    %3 = vector.load %arg3[%c0, %c0_1] : memref<4x256xbf16, #tpu.memory_space<vmem>>, vector<4x256xbf16>
    %c0_2 = arith.constant 0 : index
    %c0_3 = arith.constant 0 : index
    %4 = vector.load %arg4[%c0_2, %c0_3] : memref<256x128xbf16, #tpu.memory_space<vmem>>, vector<256x128xbf16>
    %c0_4 = arith.constant 0 : index
    %c0_5 = arith.constant 0 : index
    %5 = vector.load %arg5[%c0_4, %c0_5] : memref<1x128xf32, #tpu.memory_space<vmem>>, vector<1x128xf32>
    %6 = vector.shape_cast %5 : vector<1x128xf32> to vector<1x128xf32>
    %7 = vector.broadcast %6 : vector<1x128xf32> to vector<8x128xf32>
    %c0_6 = arith.constant 0 : index
    %c0_7 = arith.constant 0 : index
    %8 = vector.load %arg6[%c0_6, %c0_7] : memref<1x128xf32, #tpu.memory_space<vmem>>, vector<1x128xf32>
    %9 = vector.shape_cast %8 : vector<1x128xf32> to vector<1x128xf32>
    %10 = vector.broadcast %9 : vector<1x128xf32> to vector<8x128xf32>
    %c0_8 = arith.constant 0 : index
    %c0_9 = arith.constant 0 : index
    %11 = vector.load %arg10[%c0_8, %c0_9] : memref<8x128xf32, #tpu.memory_space<vmem>>, vector<8x128xf32>
    %c0_10 = arith.constant 0 : index
    %c0_11 = arith.constant 0 : index
    %12 = vector.load %arg11[%c0_10, %c0_11] : memref<8x128xf32, #tpu.memory_space<vmem>>, vector<8x128xf32>
    %c0_i32_12 = arith.constant 0 : i32
    %c8_i32 = arith.constant 8 : i32
    %13 = arith.muli %c0_i32_12, %c8_i32 : i32
    %14 = tpu.assume_multiple %13, 8 : i32
    %15 = arith.index_cast %14 : i32 to index
    %c0_13 = arith.constant 0 : index
    %c0_14 = arith.constant 0 : index
    %16 = vector.load %arg2[%15, %c0_13, %c0_14] : memref<8x8x4xbf16, #tpu.memory_space<vmem>>, vector<8x8x4xbf16>
    %17 = vector.shape_cast %16 : vector<8x8x4xbf16> to vector<64x4xbf16>
    %cst = arith.constant dense<0.000000e+00> : vector<64x256xf32>
    %18 = tpu.matmul %17, %3, %cst {dimension_numbers = #tpu.dot_dimension_numbers<[1], [0], [0], [1], [0, 0, 1, 1], [], []>} : vector<64x4xbf16>, vector<4x256xbf16>, vector<64x256xf32> -> vector<64x256xf32>
    %19 = vector.shape_cast %18 : vector<64x256xf32> to vector<8x8x256xf32>
    %20 = arith.mulf %7, %11 : vector<8x128xf32>
    %21 = arith.mulf %10, %12 : vector<8x128xf32>
    %22 = arith.subf %20, %21 : vector<8x128xf32>
    %23 = vector.extract_strided_slice %19 {offsets = [0, 0, 0], sizes = [1, 8, 128], strides = [1, 1, 1]} : vector<8x8x256xf32> to vector<1x8x128xf32>
    %24 = vector.shape_cast %23 : vector<1x8x128xf32> to vector<8x128xf32>
    %25 = arith.addf %22, %24 : vector<8x128xf32>
    %26 = arith.mulf %7, %12 : vector<8x128xf32>
    %27 = arith.mulf %10, %11 : vector<8x128xf32>
    %28 = arith.addf %26, %27 : vector<8x128xf32>
    %29 = vector.extract_strided_slice %19 {offsets = [0, 0, 128], sizes = [1, 8, 128], strides = [1, 1, 1]} : vector<8x8x256xf32> to vector<1x8x128xf32>
    %30 = vector.shape_cast %29 : vector<1x8x128xf32> to vector<8x128xf32>
    %31 = arith.addf %28, %30 : vector<8x128xf32>
    %32 = tpu.concatenate %25, %31 in 1 : vector<8x128xf32>, vector<8x128xf32> -> vector<8x256xf32>
    %33 = arith.truncf %32 : vector<8x256xf32> to vector<8x256xbf16>
    %34 = arith.mulf %7, %25 : vector<8x128xf32>
    %35 = arith.mulf %10, %31 : vector<8x128xf32>
    %36 = arith.subf %34, %35 : vector<8x128xf32>
    %37 = vector.extract_strided_slice %19 {offsets = [1, 0, 0], sizes = [1, 8, 128], strides = [1, 1, 1]} : vector<8x8x256xf32> to vector<1x8x128xf32>
    %38 = vector.shape_cast %37 : vector<1x8x128xf32> to vector<8x128xf32>
    %39 = arith.addf %36, %38 : vector<8x128xf32>
    %40 = arith.mulf %7, %31 : vector<8x128xf32>
    %41 = arith.mulf %10, %25 : vector<8x128xf32>
    %42 = arith.addf %40, %41 : vector<8x128xf32>
    %43 = vector.extract_strided_slice %19 {offsets = [1, 0, 128], sizes = [1, 8, 128], strides = [1, 1, 1]} : vector<8x8x256xf32> to vector<1x8x128xf32>
    %44 = vector.shape_cast %43 : vector<1x8x128xf32> to vector<8x128xf32>
    %45 = arith.addf %42, %44 : vector<8x128xf32>
    %46 = tpu.concatenate %39, %45 in 1 : vector<8x128xf32>, vector<8x128xf32> -> vector<8x256xf32>
    %47 = arith.truncf %46 : vector<8x256xf32> to vector<8x256xbf16>
    %48 = arith.mulf %7, %39 : vector<8x128xf32>
    %49 = arith.mulf %10, %45 : vector<8x128xf32>
    %50 = arith.subf %48, %49 : vector<8x128xf32>
    %51 = vector.extract_strided_slice %19 {offsets = [2, 0, 0], sizes = [1, 8, 128], strides = [1, 1, 1]} : vector<8x8x256xf32> to vector<1x8x128xf32>
    %52 = vector.shape_cast %51 : vector<1x8x128xf32> to vector<8x128xf32>
    %53 = arith.addf %50, %52 : vector<8x128xf32>
    %54 = arith.mulf %7, %45 : vector<8x128xf32>
    %55 = arith.mulf %10, %39 : vector<8x128xf32>
    %56 = arith.addf %54, %55 : vector<8x128xf32>
    %57 = vector.extract_strided_slice %19 {offsets = [2, 0, 128], sizes = [1, 8, 128], strides = [1, 1, 1]} : vector<8x8x256xf32> to vector<1x8x128xf32>
    %58 = vector.shape_cast %57 : vector<1x8x128xf32> to vector<8x128xf32>
    %59 = arith.addf %56, %58 : vector<8x128xf32>
    %60 = tpu.concatenate %53, %59 in 1 : vector<8x128xf32>, vector<8x128xf32> -> vector<8x256xf32>
    %61 = arith.truncf %60 : vector<8x256xf32> to vector<8x256xbf16>
    %62 = arith.mulf %7, %53 : vector<8x128xf32>
    %63 = arith.mulf %10, %59 : vector<8x128xf32>
    %64 = arith.subf %62, %63 : vector<8x128xf32>
    %65 = vector.extract_strided_slice %19 {offsets = [3, 0, 0], sizes = [1, 8, 128], strides = [1, 1, 1]} : vector<8x8x256xf32> to vector<1x8x128xf32>
    %66 = vector.shape_cast %65 : vector<1x8x128xf32> to vector<8x128xf32>
    %67 = arith.addf %64, %66 : vector<8x128xf32>
    %68 = arith.mulf %7, %59 : vector<8x128xf32>
    %69 = arith.mulf %10, %53 : vector<8x128xf32>
    %70 = arith.addf %68, %69 : vector<8x128xf32>
    %71 = vector.extract_strided_slice %19 {offsets = [3, 0, 128], sizes = [1, 8, 128], strides = [1, 1, 1]} : vector<8x8x256xf32> to vector<1x8x128xf32>
    %72 = vector.shape_cast %71 : vector<1x8x128xf32> to vector<8x128xf32>
    %73 = arith.addf %70, %72 : vector<8x128xf32>
    %74 = tpu.concatenate %67, %73 in 1 : vector<8x128xf32>, vector<8x128xf32> -> vector<8x256xf32>
    %75 = arith.truncf %74 : vector<8x256xf32> to vector<8x256xbf16>
    %76 = arith.mulf %7, %67 : vector<8x128xf32>
    %77 = arith.mulf %10, %73 : vector<8x128xf32>
    %78 = arith.subf %76, %77 : vector<8x128xf32>
    %79 = vector.extract_strided_slice %19 {offsets = [4, 0, 0], sizes = [1, 8, 128], strides = [1, 1, 1]} : vector<8x8x256xf32> to vector<1x8x128xf32>
    %80 = vector.shape_cast %79 : vector<1x8x128xf32> to vector<8x128xf32>
    %81 = arith.addf %78, %80 : vector<8x128xf32>
    %82 = arith.mulf %7, %73 : vector<8x128xf32>
    %83 = arith.mulf %10, %67 : vector<8x128xf32>
    %84 = arith.addf %82, %83 : vector<8x128xf32>
    %85 = vector.extract_strided_slice %19 {offsets = [4, 0, 128], sizes = [1, 8, 128], strides = [1, 1, 1]} : vector<8x8x256xf32> to vector<1x8x128xf32>
    %86 = vector.shape_cast %85 : vector<1x8x128xf32> to vector<8x128xf32>
    %87 = arith.addf %84, %86 : vector<8x128xf32>
    %88 = tpu.concatenate %81, %87 in 1 : vector<8x128xf32>, vector<8x128xf32> -> vector<8x256xf32>
    %89 = arith.truncf %88 : vector<8x256xf32> to vector<8x256xbf16>
    %90 = arith.mulf %7, %81 : vector<8x128xf32>
    %91 = arith.mulf %10, %87 : vector<8x128xf32>
    %92 = arith.subf %90, %91 : vector<8x128xf32>
    %93 = vector.extract_strided_slice %19 {offsets = [5, 0, 0], sizes = [1, 8, 128], strides = [1, 1, 1]} : vector<8x8x256xf32> to vector<1x8x128xf32>
    %94 = vector.shape_cast %93 : vector<1x8x128xf32> to vector<8x128xf32>
    %95 = arith.addf %92, %94 : vector<8x128xf32>
    %96 = arith.mulf %7, %87 : vector<8x128xf32>
    %97 = arith.mulf %10, %81 : vector<8x128xf32>
    %98 = arith.addf %96, %97 : vector<8x128xf32>
    %99 = vector.extract_strided_slice %19 {offsets = [5, 0, 128], sizes = [1, 8, 128], strides = [1, 1, 1]} : vector<8x8x256xf32> to vector<1x8x128xf32>
    %100 = vector.shape_cast %99 : vector<1x8x128xf32> to vector<8x128xf32>
    %101 = arith.addf %98, %100 : vector<8x128xf32>
    %102 = tpu.concatenate %95, %101 in 1 : vector<8x128xf32>, vector<8x128xf32> -> vector<8x256xf32>
    %103 = arith.truncf %102 : vector<8x256xf32> to vector<8x256xbf16>
    %104 = arith.mulf %7, %95 : vector<8x128xf32>
    %105 = arith.mulf %10, %101 : vector<8x128xf32>
    %106 = arith.subf %104, %105 : vector<8x128xf32>
    %107 = vector.extract_strided_slice %19 {offsets = [6, 0, 0], sizes = [1, 8, 128], strides = [1, 1, 1]} : vector<8x8x256xf32> to vector<1x8x128xf32>
    %108 = vector.shape_cast %107 : vector<1x8x128xf32> to vector<8x128xf32>
    %109 = arith.addf %106, %108 : vector<8x128xf32>
    %110 = arith.mulf %7, %101 : vector<8x128xf32>
    %111 = arith.mulf %10, %95 : vector<8x128xf32>
    %112 = arith.addf %110, %111 : vector<8x128xf32>
    %113 = vector.extract_strided_slice %19 {offsets = [6, 0, 128], sizes = [1, 8, 128], strides = [1, 1, 1]} : vector<8x8x256xf32> to vector<1x8x128xf32>
    %114 = vector.shape_cast %113 : vector<1x8x128xf32> to vector<8x128xf32>
    %115 = arith.addf %112, %114 : vector<8x128xf32>
    %116 = tpu.concatenate %109, %115 in 1 : vector<8x128xf32>, vector<8x128xf32> -> vector<8x256xf32>
    %117 = arith.truncf %116 : vector<8x256xf32> to vector<8x256xbf16>
    %118 = arith.mulf %7, %109 : vector<8x128xf32>
    %119 = arith.mulf %10, %115 : vector<8x128xf32>
    %120 = arith.subf %118, %119 : vector<8x128xf32>
    %121 = vector.extract_strided_slice %19 {offsets = [7, 0, 0], sizes = [1, 8, 128], strides = [1, 1, 1]} : vector<8x8x256xf32> to vector<1x8x128xf32>
    %122 = vector.shape_cast %121 : vector<1x8x128xf32> to vector<8x128xf32>
    %123 = arith.addf %120, %122 : vector<8x128xf32>
    %124 = arith.mulf %7, %115 : vector<8x128xf32>
    %125 = arith.mulf %10, %109 : vector<8x128xf32>
    %126 = arith.addf %124, %125 : vector<8x128xf32>
    %127 = vector.extract_strided_slice %19 {offsets = [7, 0, 128], sizes = [1, 8, 128], strides = [1, 1, 1]} : vector<8x8x256xf32> to vector<1x8x128xf32>
    %128 = vector.shape_cast %127 : vector<1x8x128xf32> to vector<8x128xf32>
    %129 = arith.addf %126, %128 : vector<8x128xf32>
    %130 = tpu.concatenate %123, %129 in 1 : vector<8x128xf32>, vector<8x128xf32> -> vector<8x256xf32>
    %131 = arith.truncf %130 : vector<8x256xf32> to vector<8x256xbf16>
    %132 = tpu.concatenate %33, %47, %61, %75, %89, %103, %117, %131 in 0 : vector<8x256xbf16>, vector<8x256xbf16>, vector<8x256xbf16>, vector<8x256xbf16>, vector<8x256xbf16>, vector<8x256xbf16>, vector<8x256xbf16>, vector<8x256xbf16> -> vector<64x256xbf16>
    %cst_15 = arith.constant dense<0.000000e+00> : vector<64x128xf32>
    %133 = tpu.matmul %132, %4, %cst_15 {dimension_numbers = #tpu.dot_dimension_numbers<[1], [0], [0], [1], [0, 0, 1, 1], [], []>} : vector<64x256xbf16>, vector<256x128xbf16>, vector<64x128xf32> -> vector<64x128xf32>
    %134 = vector.shape_cast %133 : vector<64x128xf32> to vector<8x8x128xf32>
    %135 = arith.truncf %134 : vector<8x8x128xf32> to vector<8x8x128xbf16>
    %136 = arith.index_cast %14 : i32 to index
    %c0_16 = arith.constant 0 : index
    %c0_17 = arith.constant 0 : index
    %137 = vector.load %arg9[%136, %c0_16, %c0_17] : memref<8x8x128xbf16, #tpu.memory_space<vmem>>, vector<8x8x128xbf16>
    tpu.vector_store %arg9[%136, %c0_16, %c0_17], %135 {strides = array<i32>} : memref<8x8x128xbf16, #tpu.memory_space<vmem>>, vector<8x8x128xbf16>,
    %c1_i32 = arith.constant 1 : i32
    %c0_18 = arith.constant 0 : index
    %c0_19 = arith.constant 0 : index
    %138 = vector.load %arg10[%c0_18, %c0_19] : memref<8x128xf32, #tpu.memory_space<vmem>>, vector<8x128xf32>
    tpu.vector_store %arg10[%c0_18, %c0_19], %123 {strides = array<i32>} : memref<8x128xf32, #tpu.memory_space<vmem>>, vector<8x128xf32>,
    %c0_20 = arith.constant 0 : index
    %c0_21 = arith.constant 0 : index
    %139 = vector.load %arg11[%c0_20, %c0_21] : memref<8x128xf32, #tpu.memory_space<vmem>>, vector<8x128xf32>
    tpu.vector_store %arg11[%c0_20, %c0_21], %129 {strides = array<i32>} : memref<8x128xf32, #tpu.memory_space<vmem>>, vector<8x128xf32>,
    return
  }
  func.func @transform_0(%arg0: i32, %arg1: i32) -> (i32, i32, i32) {
    %c0_i32 = arith.constant 0 : i32
    %c0_i32_0 = arith.constant 0 : i32
    return %arg1, %arg0, %c0_i32 : i32, i32, i32
  }
  func.func @transform_1(%arg0: i32, %arg1: i32) -> (i32, i32) {
    %c0_i32 = arith.constant 0 : i32
    %c0_i32_0 = arith.constant 0 : i32
    %c0_i32_1 = arith.constant 0 : i32
    return %c0_i32, %c0_i32_0 : i32, i32
  }
  func.func @transform_2(%arg0: i32, %arg1: i32) -> (i32, i32) {
    %c0_i32 = arith.constant 0 : i32
    %c0_i32_0 = arith.constant 0 : i32
    %c0_i32_1 = arith.constant 0 : i32
    return %c0_i32, %c0_i32_0 : i32, i32
  }
  func.func @transform_3(%arg0: i32, %arg1: i32) -> (i32, i32) {
    %c0_i32 = arith.constant 0 : i32
    %c0_i32_0 = arith.constant 0 : i32
    %c0_i32_1 = arith.constant 0 : i32
    return %c0_i32, %c0_i32_0 : i32, i32
  }
  func.func @transform_4(%arg0: i32, %arg1: i32) -> (i32, i32) {
    %c0_i32 = arith.constant 0 : i32
    %c0_i32_0 = arith.constant 0 : i32
    %c0_i32_1 = arith.constant 0 : i32
    return %c0_i32, %c0_i32_0 : i32, i32
  }
  func.func @transform_5(%arg0: i32, %arg1: i32) -> (i32, i32) {
    %c0_i32 = arith.constant 0 : i32
    %c0_i32_0 = arith.constant 0 : i32
    return %arg0, %c0_i32 : i32, i32
  }
  func.func @transform_6(%arg0: i32, %arg1: i32) -> (i32, i32) {
    %c0_i32 = arith.constant 0 : i32
    %c0_i32_0 = arith.constant 0 : i32
    return %arg0, %c0_i32 : i32, i32
  }
  func.func @transform_7(%arg0: i32, %arg1: i32) -> (i32, i32, i32) {
    %c0_i32 = arith.constant 0 : i32
    %c0_i32_0 = arith.constant 0 : i32
    return %arg1, %arg0, %c0_i32 : i32, i32, i32
  }
  func.func @transform_8(%arg0: i32, %arg1: i32) -> (i32, i32) {
    %c0_i32 = arith.constant 0 : i32
    %c0_i32_0 = arith.constant 0 : i32
    return %arg0, %c0_i32 : i32, i32
  }
  func.func @transform_9(%arg0: i32, %arg1: i32) -> (i32, i32) {
    %c0_i32 = arith.constant 0 : i32
    %c0_i32_0 = arith.constant 0 : i32
    return %arg0, %c0_i32 : i32, i32
  }
}

</mosaic_0001>

<llo_original>
// kernel: tpu_custom_call.1
$region0: #{tpu_custom_call.1}
  #allocation0 [shape = 'u32[]', space=smem, size = 0x4, offset = 0x4, fixed_abs, tag = 'smem constant byte address 0x4 - core index']
  #allocation1 [shape = 'u32[144,128]{1,0:T(1,128)}', space=vmem, size = 0x12000, scoped, tag = 'internal scratch']
  %s0 = inlined_call_operand.vmem [shape: bf16[8,8,4], index: 0, kind: input, shape index: {}]
  %s1 = inlined_call_operand.vmem [shape: bf16[4,256], index: 1, kind: input, shape index: {}]
  %s2 = inlined_call_operand.hbm [shape: bf16[256,128], index: 2, kind: input, shape index: {}]
  %s3 = inlined_call_operand.vmem [shape: f32[1,128], index: 3, kind: input, shape index: {}]
  %s4 = inlined_call_operand.vmem [shape: f32[1,128], index: 4, kind: input, shape index: {}]
  %s5 = inlined_call_operand.vmem [shape: f32[8,128], index: 5, kind: input, shape index: {}]
  %s6 = inlined_call_operand.vmem [shape: f32[8,128], index: 6, kind: input, shape index: {}]
  %s7 = inlined_call_operand.hbm [shape: bf16[8,8,128], index: 7, kind: output, shape index: {0}]
  %s8 = inlined_call_operand.hbm [shape: f32[8,128], index: 8, kind: output, shape index: {1}]
  %s9 = inlined_call_operand.hbm [shape: f32[8,128], index: 9, kind: output, shape index: {2}]
  %10 = xla_tuple %s7, %s8, %s9
  %s11 = sld [smem:[#allocation0]]
  $region62: #{tpu_custom_call.1} parent=0
    _
  %s13 = ssub.s32 1, %s11
  %s14 = scalar_select 0, %s13, %s11
  $region1: #{tpu_custom_call.1} parent=0
    #allocation2 [shape = 'u8[65536]{0}', space=vmem, size = 0x10000, scoped, tag = 'input window, operand 2, single buffered']
    #allocation3 [shape = 's32[1]{0}', space=sflag, size = 0x4, scoped, tag = 'scoped memory for tpu_custom_call.1']
    #allocation4 [shape = 's32[1]{0}', space=sflag, size = 0x4, scoped, tag = 'scoped memory for tpu_custom_call.1']
    #allocation5 [shape = 'u8[16384]{0}', space=vmem, size = 0x4000, scoped, tag = 'output window, operand 0, single buffered']
    #allocation6 [shape = 'u8[4096]{0}', space=vmem, size = 0x1000, scoped, tag = 'output window, operand 1, single buffered']
    #allocation7 [shape = 's32[1]{0}', space=sflag, size = 0x4, scoped, tag = 'scoped memory for tpu_custom_call.1']
    #allocation8 [shape = 'u8[4096]{0}', space=vmem, size = 0x1000, scoped, tag = 'output window, operand 2, single buffered']
    %15 = vsyncpa [#allocation3], 0
    %16 = vsyncpa [#allocation4], 0
    %17 = vsyncpa [#allocation7], 0
    // Predicated region
    $region2: #{tpu_custom_call.1} parent=1 // pred_check
      _
    $region3: #{tpu_custom_call.1} parent=1 // pred_check_branch
      %19 = sbr.rel (0) target = $region5
    $region4: #{tpu_custom_call.1} parent=1 // pred_region
      _
    $region5: #{tpu_custom_call.1} parent=1 // pred_fallthru
      _
    // Predicated region
    $region6: #{tpu_custom_call.1} parent=1 // pred_check
      _
    $region7: #{tpu_custom_call.1} parent=1 // pred_check_branch
      %21 = sbr.rel (0) target = $region9
    $region8: #{tpu_custom_call.1} parent=1 // pred_region
      _
    $region9: #{tpu_custom_call.1} parent=1 // pred_fallthru
      _
    // Predicated region
    $region10: #{tpu_custom_call.1} parent=1 // pred_check
      _
    $region11: #{tpu_custom_call.1} parent=1 // pred_check_branch
      %23 = sbr.rel (0) target = $region13
    $region12: #{tpu_custom_call.1} parent=1 // pred_region
      %s25 = ssub.s32 2048, 2048
      %26 = vsyncadd [#allocation3], %s25
      %s27 = sshll.u32 [#allocation2], 4
      %s28 = int_to_ptr.vmem [resolvable:$true] %s27
      %33 = dma.hbm_to_vmem [thread:$0]  %s2, 2048, %s28, [#allocation3], 64, 64, 4
    $region13: #{tpu_custom_call.1} parent=1 // pred_fallthru
      _
    // Predicated region
    $region14: #{tpu_custom_call.1} parent=1 // pred_check
      _
    $region15: #{tpu_custom_call.1} parent=1 // pred_check_branch
      %35 = sbr.rel (0) target = $region17
    $region16: #{tpu_custom_call.1} parent=1 // pred_region
      _
    $region17: #{tpu_custom_call.1} parent=1 // pred_fallthru
      _
    // Predicated region
    $region18: #{tpu_custom_call.1} parent=1 // pred_check
      _
    $region19: #{tpu_custom_call.1} parent=1 // pred_check_branch
      %37 = sbr.rel (0) target = $region21
    $region20: #{tpu_custom_call.1} parent=1 // pred_region
      _
    $region21: #{tpu_custom_call.1} parent=1 // pred_fallthru
      _
    // Predicated region
    $region22: #{tpu_custom_call.1} parent=1 // pred_check
      _
    $region23: #{tpu_custom_call.1} parent=1 // pred_check_branch
      %39 = sbr.rel (0) target = $region25
    $region24: #{tpu_custom_call.1} parent=1 // pred_region
      _
    $region25: #{tpu_custom_call.1} parent=1 // pred_fallthru
      _
    // Predicated region
    $region26: #{tpu_custom_call.1} parent=1 // pred_check
      _
    $region27: #{tpu_custom_call.1} parent=1 // pred_check_branch
      %41 = sbr.rel (0) target = $region29
    $region28: #{tpu_custom_call.1} parent=1 // pred_region
      _
    $region29: #{tpu_custom_call.1} parent=1 // pred_fallthru
      _
    // Predicated region
    $region30: #{tpu_custom_call.1} parent=1 // pred_check
      _
    $region31: #{tpu_custom_call.1} parent=1 // pred_check_branch
      %43 = sbr.rel (0) target = $region33
    $region32: #{tpu_custom_call.1} parent=1 // pred_region
      %44 = dma.done [#allocation3], 2048
    $region33: #{tpu_custom_call.1} parent=1 // pred_fallthru
      _
    %p46 = scmp.eq.s32.totalorder 0, 0
    // Predicated region
    $region34: #{tpu_custom_call.1} parent=1 // pred_check
      %p47 = pneg %p46
    $region35: #{tpu_custom_call.1} parent=1 // pred_check_branch
      %49 = sbr.rel (%p47) target = $region37
    $region36: #{tpu_custom_call.1} parent=1 // pred_region
      %v50 = vld [vmem:[%s5] sm:$0xff]
      %51 = vst [vmem:[#allocation6] sm:$0xff] %v50
      %v52 = vld [vmem:[%s6] sm:$0xff]
      %53 = vst [vmem:[#allocation8] sm:$0xff] %v52
    $region37: #{tpu_custom_call.1} parent=1 // pred_fallthru
      _
    %v54 = vld [vmem:[%s1] sm:$0xf]
    %v55 = vld [vmem:[#allocation2] sm:$0xf]
    %v56 = vld [vmem:[#allocation2 + $0x4] sm:$0xf]
    %v57 = vld [vmem:[#allocation2 + $0x8] sm:$0xf]
    %v58 = vld [vmem:[#allocation2 + $0xc] sm:$0xf]
    %v59 = vld [vmem:[#allocation2 + $0x10] sm:$0xf]
    %v60 = vld [vmem:[#allocation2 + $0x14] sm:$0xf]
    %v61 = vld [vmem:[#allocation2 + $0x18] sm:$0xf]
    %v62 = vld [vmem:[#allocation2 + $0x1c] sm:$0xf]
    %v63 = vld [vmem:[#allocation2 + $0x20] sm:$0xf]
    %v64 = vld [vmem:[#allocation2 + $0x24] sm:$0xf]
    %v65 = vld [vmem:[#allocation2 + $0x28] sm:$0xf]
    %v66 = vld [vmem:[#allocation2 + $0x2c] sm:$0xf]
    %v67 = vld [vmem:[#allocation2 + $0x30] sm:$0xf]
    %v68 = vld [vmem:[#allocation2 + $0x34] sm:$0xf]
    %v69 = vld [vmem:[#allocation2 + $0x38] sm:$0xf]
    %v70 = vld [vmem:[#allocation2 + $0x3c] sm:$0xf]
    %v71 = vld [vmem:[#allocation2 + $0x40] sm:$0xf]
    %v72 = vld [vmem:[#allocation2 + $0x44] sm:$0xf]
    %v73 = vld [vmem:[#allocation2 + $0x48] sm:$0xf]
    %v74 = vld [vmem:[#allocation2 + $0x4c] sm:$0xf]
    %v75 = vld [vmem:[#allocation2 + $0x50] sm:$0xf]
    %v76 = vld [vmem:[#allocation2 + $0x54] sm:$0xf]
    %v77 = vld [vmem:[#allocation2 + $0x58] sm:$0xf]
    %v78 = vld [vmem:[#allocation2 + $0x5c] sm:$0xf]
    %v79 = vld [vmem:[#allocation2 + $0x60] sm:$0xf]
    %v80 = vld [vmem:[#allocation2 + $0x64] sm:$0xf]
    %v81 = vld [vmem:[#allocation2 + $0x68] sm:$0xf]
    %v82 = vld [vmem:[#allocation2 + $0x6c] sm:$0xf]
    %v83 = vld [vmem:[#allocation2 + $0x70] sm:$0xf]
    %v84 = vld [vmem:[#allocation2 + $0x74] sm:$0xf]
    %v85 = vld [vmem:[#allocation2 + $0x78] sm:$0xf]
    %v86 = vld [vmem:[#allocation2 + $0x7c] sm:$0xf]
    %v87 = vld [vmem:[%s3] sm:$0x1]
    %v89 = vlaneseq
    %v90 = vshrl.u32 %v89, 7
    %v91 = vsub.s32 0, %v90
    %v92 = vrot.slane %v87, %v91
    %v94 = vld [vmem:[%s4] sm:$0x1]
    %v96 = vlaneseq
    %v97 = vshrl.u32 %v96, 7
    %v98 = vsub.s32 0, %v97
    %v99 = vrot.slane %v94, %v98
    %v101 = vld [vmem:[#allocation6] sm:$0xff]
    %v102 = vld [vmem:[#allocation8] sm:$0xff]
    %v103 = vld [vmem:[%s0] sm:$0xf]
    %v104 = vld [vmem:[%s0 + $0x4] sm:$0xf]
    %v105 = vld [vmem:[%s0 + $0x8] sm:$0xf]
    %v106 = vld [vmem:[%s0 + $0xc] sm:$0xf]
    %v107 = vld [vmem:[%s0 + $0x10] sm:$0xf]
    %v108 = vld [vmem:[%s0 + $0x14] sm:$0xf]
    %v109 = vld [vmem:[%s0 + $0x18] sm:$0xf]
    %v110 = vld [vmem:[%s0 + $0x1c] sm:$0xf]
    %v119 = vunpack.c.l.b16 %v103
    %v120 = vunpack.c.l.b16 %v104
    %v121 = vunpack.c.l.b16 %v105
    %v122 = vunpack.c.l.b16 %v106
    %v123 = vunpack.c.l.b16 %v107
    %v124 = vunpack.c.l.b16 %v108
    %v125 = vunpack.c.l.b16 %v109
    %v126 = vunpack.c.l.b16 %v110
    %v127 = vpack.c.b16 %v120, %v119
    %v128 = vpack.c.b16 %v122, %v121
    %v129 = vpack.c.b16 %v124, %v123
    %v130 = vpack.c.b16 %v126, %v125
    %v133 = vunpack.c.l.s4 1983009808
    %v134 = vunpack.c.0.s8 %v133
    %v135 = vlaneseq
    %v136 = vshrl.u32 %v135, 7
    %v137 = vsub.s32 %v134, %v136
    %v138 = vrot.slane %v54, %v137
    %v139 = vcombine.high %v138, %v138
    %vm140 = vcmask 31744
    %v142 = vsel %vm140, %v127, 0
    %v145 = vsel %vm140, %v128, 0
    %v148 = vsel %vm140, %v129, 0
    %v151 = vsel %vm140, %v130, 0
    %vm153 = vcmask 1041408
    %v155 = vsel %vm153, %v138, 0
    %v158 = vsel %vm153, %v139, 0
    %160 = vmatprep.subr.bf16.mxu0 %v158
    %161 = vmatpush1.bf16.msra.mxu0 %v155
    %162 = vmatprep.subr.bf16.mxu0 0
    %163 = vmatpush1.bf16.msra.mxu0 0
    %164 = vmatprep.subr.bf16.mxu0 0
    %165 = vmatpush1.bf16.msra.mxu0 0
    %166 = vmatprep.subr.bf16.mxu0 0
    %167 = vmatpush1.bf16.msra.mxu0 0
    %168 = vmatprep.subr.bf16.mxu0 0
    %169 = vmatpush1.bf16.msra.mxu0 0
    %170 = vmatprep.subr.bf16.mxu0 0
    %171 = vmatpush1.bf16.msra.mxu0 0
    %172 = vmatprep.subr.bf16.mxu0 0
    %173 = vmatpush1.bf16.msra.mxu0 0
    %174 = vmatprep.subr.bf16.mxu0 0
    %175 = vmatpush1.bf16.msra.mxu0 0
    %176 = vmatprep.subr.bf16.mxu0 0
    %177 = vmatpush1.bf16.msra.mxu0 0
    %178 = vmatprep.subr.bf16.mxu0 0
    %179 = vmatpush1.bf16.msra.mxu0 0
    %180 = vmatprep.subr.bf16.mxu0 0
    %181 = vmatpush1.bf16.msra.mxu0 0
    %182 = vmatprep.subr.bf16.mxu0 0
    %183 = vmatpush1.bf16.msra.mxu0 0
    %184 = vmatprep.subr.bf16.mxu0 0
    %185 = vmatpush1.bf16.msra.mxu0 0
    %186 = vmatprep.subr.bf16.mxu0 0
    %187 = vmatpush1.bf16.msra.mxu0 0
    %188 = vmatprep.subr.bf16.mxu0 0
    %189 = vmatpush1.bf16.msra.mxu0 0
    %190 = vmatprep.subr.bf16.mxu0 0
    %191 = vmatpush1.bf16.msra.mxu0 0
    %192 = vmatprep.mubr.bf16.mxu0 0
    %193 = vmatmul.mubr.bf16.gmra.mrb[0].mxu0 %v142
    %v194 = vpop.f32.mrb[0].mxu0
    %v195 = vadd.f32 0.0, %v194
    %v196 = vpop.f32.mrb[0].mxu0
    %v197 = vadd.f32 0.0, %v196
    %v198 = vpop.f32.mrb[0].mxu0
    %v199 = vadd.f32 0.0, %v198
    %v200 = vpop.f32.mrb[0].mxu0
    %v201 = vadd.f32 0.0, %v200
    %202 = vmatprep.mubr.bf16.mxu0 0
    %203 = vmatmul.mubr.bf16.gmra.mrb[0].mxu0 %v145
    %v204 = vpop.f32.mrb[0].mxu0
    %v205 = vadd.f32 0.0, %v204
    %v206 = vpop.f32.mrb[0].mxu0
    %v207 = vadd.f32 0.0, %v206
    %v208 = vpop.f32.mrb[0].mxu0
    %v209 = vadd.f32 0.0, %v208
    %v210 = vpop.f32.mrb[0].mxu0
    %v211 = vadd.f32 0.0, %v210
    %212 = vmatprep.mubr.bf16.mxu0 0
    %213 = vmatmul.mubr.bf16.gmra.mrb[0].mxu0 %v148
    %v214 = vpop.f32.mrb[0].mxu0
    %v215 = vadd.f32 0.0, %v214
    %v216 = vpop.f32.mrb[0].mxu0
    %v217 = vadd.f32 0.0, %v216
    %v218 = vpop.f32.mrb[0].mxu0
    %v219 = vadd.f32 0.0, %v218
    %v220 = vpop.f32.mrb[0].mxu0
    %v221 = vadd.f32 0.0, %v220
    %222 = vmatprep.mubr.bf16.mxu0 0
    %223 = vmatmul.mubr.bf16.gmra.mrb[0].mxu0 %v151
    %v224 = vpop.f32.mrb[0].mxu0
    %v225 = vadd.f32 0.0, %v224
    %v226 = vpop.f32.mrb[0].mxu0
    %v227 = vadd.f32 0.0, %v226
    %v228 = vpop.f32.mrb[0].mxu0
    %v229 = vadd.f32 0.0, %v228
    %v230 = vpop.f32.mrb[0].mxu0
    %v231 = vadd.f32 0.0, %v230
    %232 = vdwg.mxu0
    %v233 = vmul.f32 %v92, %v101
    %v234 = vmul.f32 %v99, %v102
    %v235 = vsub.f32 %v233, %v234
    %v236 = vadd.f32 %v235, %v195
    %v237 = vmul.f32 %v92, %v102
    %v238 = vmul.f32 %v99, %v101
    %v239 = vadd.f32 %v237, %v238
    %v240 = vadd.f32 %v239, %v197
    %v241 = vpack.c.bf16 %v236, %v236
    %v242 = vpack.c.bf16 %v240, %v240
    %v243 = vmul.f32 %v92, %v236
    %v244 = vmul.f32 %v99, %v240
    %v245 = vsub.f32 %v243, %v244
    %v246 = vadd.f32 %v245, %v199
    %v247 = vmul.f32 %v92, %v240
    %v248 = vmul.f32 %v99, %v236
    %v249 = vadd.f32 %v247, %v248
    %v250 = vadd.f32 %v249, %v201
    %v251 = vpack.c.bf16 %v246, %v246
    %v252 = vpack.c.bf16 %v250, %v250
    %v253 = vmul.f32 %v92, %v246
    %v254 = vmul.f32 %v99, %v250
    %v255 = vsub.f32 %v253, %v254
    %v256 = vadd.f32 %v255, %v205
    %v257 = vmul.f32 %v92, %v250
    %v258 = vmul.f32 %v99, %v246
    %v259 = vadd.f32 %v257, %v258
    %v260 = vadd.f32 %v259, %v207
    %v261 = vpack.c.bf16 %v256, %v256
    %v262 = vpack.c.bf16 %v260, %v260
    %v263 = vmul.f32 %v92, %v256
    %v264 = vmul.f32 %v99, %v260
    %v265 = vsub.f32 %v263, %v264
    %v266 = vadd.f32 %v265, %v209
    %v267 = vmul.f32 %v92, %v260
    %v268 = vmul.f32 %v99, %v256
    %v269 = vadd.f32 %v267, %v268
    %v270 = vadd.f32 %v269, %v211
    %v271 = vpack.c.bf16 %v266, %v266
    %v272 = vpack.c.bf16 %v270, %v270
    %v273 = vmul.f32 %v92, %v266
    %v274 = vmul.f32 %v99, %v270
    %v275 = vsub.f32 %v273, %v274
    %v276 = vadd.f32 %v275, %v215
    %v277 = vmul.f32 %v92, %v270
    %v278 = vmul.f32 %v99, %v266
    %v279 = vadd.f32 %v277, %v278
    %v280 = vadd.f32 %v279, %v217
    %v281 = vpack.c.bf16 %v276, %v276
    %v282 = vpack.c.bf16 %v280, %v280
    %v283 = vmul.f32 %v92, %v276
    %v284 = vmul.f32 %v99, %v280
    %v285 = vsub.f32 %v283, %v284
    %v286 = vadd.f32 %v285, %v219
    %v287 = vmul.f32 %v92, %v280
    %v288 = vmul.f32 %v99, %v276
    %v289 = vadd.f32 %v287, %v288
    %v290 = vadd.f32 %v289, %v221
    %v291 = vpack.c.bf16 %v286, %v286
    %v292 = vpack.c.bf16 %v290, %v290
    %v293 = vmul.f32 %v92, %v286
    %v294 = vmul.f32 %v99, %v290
    %v295 = vsub.f32 %v293, %v294
    %v296 = vadd.f32 %v295, %v225
    %v297 = vmul.f32 %v92, %v290
    %v298 = vmul.f32 %v99, %v286
    %v299 = vadd.f32 %v297, %v298
    %v300 = vadd.f32 %v299, %v227
    %v301 = vpack.c.bf16 %v296, %v296
    %v302 = vpack.c.bf16 %v300, %v300
    %v303 = vmul.f32 %v92, %v296
    %v304 = vmul.f32 %v99, %v300
    %v305 = vsub.f32 %v303, %v304
    %v306 = vadd.f32 %v305, %v229
    %v307 = vmul.f32 %v92, %v300
    %v308 = vmul.f32 %v99, %v296
    %v309 = vadd.f32 %v307, %v308
    %v310 = vadd.f32 %v309, %v231
    %v311 = vpack.c.bf16 %v306, %v306
    %v312 = vpack.c.bf16 %v310, %v310
    %v315 = vrot.slane %v251, 4
    %v316 = vrot.slane %v252, 4
    %v319 = vrot.slane %v271, 4
    %v320 = vrot.slane %v272, 4
    %v323 = vrot.slane %v291, 4
    %v324 = vrot.slane %v292, 4
    %v327 = vrot.slane %v311, 4
    %v328 = vrot.slane %v312, 4
    %vm329 = vcmask 1043456
    %v332 = vsel %vm329, %v241, %v315
    %v336 = vsel %vm329, %v242, %v316
    %v340 = vsel %vm329, %v261, %v319
    %v344 = vsel %vm329, %v262, %v320
    %v348 = vsel %vm329, %v281, %v323
    %v352 = vsel %vm329, %v282, %v324
    %v356 = vsel %vm329, %v301, %v327
    %v360 = vsel %vm329, %v302, %v328
    %v394 = vunpack.c.l.b16 %v55
    %v395 = vunpack.c.l.b16 %v56
    %v396 = vunpack.c.l.b16 %v57
    %v397 = vunpack.c.l.b16 %v58
    %v398 = vunpack.c.l.b16 %v59
    %v399 = vunpack.c.l.b16 %v60
    %v400 = vunpack.c.l.b16 %v61
    %v401 = vunpack.c.l.b16 %v62
    %v402 = vunpack.c.l.b16 %v63
    %v403 = vunpack.c.l.b16 %v64
    %v404 = vunpack.c.l.b16 %v65
    %v405 = vunpack.c.l.b16 %v66
    %v406 = vunpack.c.l.b16 %v67
    %v407 = vunpack.c.l.b16 %v68
    %v408 = vunpack.c.l.b16 %v69
    %v409 = vunpack.c.l.b16 %v70
    %v410 = vunpack.c.l.b16 %v71
    %v411 = vunpack.c.l.b16 %v72
    %v412 = vunpack.c.l.b16 %v73
    %v413 = vunpack.c.l.b16 %v74
    %v414 = vunpack.c.l.b16 %v75
    %v415 = vunpack.c.l.b16 %v76
    %v416 = vunpack.c.l.b16 %v77
    %v417 = vunpack.c.l.b16 %v78
    %v418 = vunpack.c.l.b16 %v79
    %v419 = vunpack.c.l.b16 %v80
    %v420 = vunpack.c.l.b16 %v81
    %v421 = vunpack.c.l.b16 %v82
    %v422 = vunpack.c.l.b16 %v83
    %v423 = vunpack.c.l.b16 %v84
    %v424 = vunpack.c.l.b16 %v85
    %v425 = vunpack.c.l.b16 %v86
    %v426 = vpack.c.b16 %v395, %v394
    %v427 = vpack.c.b16 %v397, %v396
    %v428 = vpack.c.b16 %v399, %v398
    %v429 = vpack.c.b16 %v401, %v400
    %v430 = vpack.c.b16 %v403, %v402
    %v431 = vpack.c.b16 %v405, %v404
    %v432 = vpack.c.b16 %v407, %v406
    %v433 = vpack.c.b16 %v409, %v408
    %v434 = vpack.c.b16 %v411, %v410
    %v435 = vpack.c.b16 %v413, %v412
    %v436 = vpack.c.b16 %v415, %v414
    %v437 = vpack.c.b16 %v417, %v416
    %v438 = vpack.c.b16 %v419, %v418
    %v439 = vpack.c.b16 %v421, %v420
    %v440 = vpack.c.b16 %v423, %v422
    %v441 = vpack.c.b16 %v425, %v424
    %458 = vmatprep.subr.bf16.mxu0 0
    %459 = vmatpush1.bf16.msra.mxu0 %v426
    %460 = vmatprep.subr.bf16.mxu0 0
    %461 = vmatpush1.bf16.msra.mxu0 %v427
    %462 = vmatprep.subr.bf16.mxu0 0
    %463 = vmatpush1.bf16.msra.mxu0 %v428
    %464 = vmatprep.subr.bf16.mxu0 0
    %465 = vmatpush1.bf16.msra.mxu0 %v429
    %466 = vmatprep.subr.bf16.mxu0 0
    %467 = vmatpush1.bf16.msra.mxu0 %v430
    %468 = vmatprep.subr.bf16.mxu0 0
    %469 = vmatpush1.bf16.msra.mxu0 %v431
    %470 = vmatprep.subr.bf16.mxu0 0
    %471 = vmatpush1.bf16.msra.mxu0 %v432
    %472 = vmatprep.subr.bf16.mxu0 0
    %473 = vmatpush1.bf16.msra.mxu0 %v433
    %474 = vmatprep.subr.bf16.mxu0 0
    %475 = vmatpush1.bf16.msra.mxu0 %v434
    %476 = vmatprep.subr.bf16.mxu0 0
    %477 = vmatpush1.bf16.msra.mxu0 %v435
    %478 = vmatprep.subr.bf16.mxu0 0
    %479 = vmatpush1.bf16.msra.mxu0 %v436
    %480 = vmatprep.subr.bf16.mxu0 0
    %481 = vmatpush1.bf16.msra.mxu0 %v437
    %482 = vmatprep.subr.bf16.mxu0 0
    %483 = vmatpush1.bf16.msra.mxu0 %v438
    %484 = vmatprep.subr.bf16.mxu0 0
    %485 = vmatpush1.bf16.msra.mxu0 %v439
    %486 = vmatprep.subr.bf16.mxu0 0
    %487 = vmatpush1.bf16.msra.mxu0 %v440
    %488 = vmatprep.subr.bf16.mxu0 0
    %489 = vmatpush1.bf16.msra.mxu0 %v441
    %490 = vmatprep.mubr.bf16.mxu0 %v336
    %491 = vmatmul.mubr.bf16.gmra.mrb[0].mxu0 %v332
    %v492 = vpop.f32.mrb[0].mxu0
    %v493 = vadd.f32 0.0, %v492
    %v494 = vpop.f32.mrb[0].mxu0
    %v495 = vpop.f32.mrb[0].mxu0
    %v496 = vadd.f32 0.0, %v495
    %v497 = vpop.f32.mrb[0].mxu0
    %498 = vmatprep.mubr.bf16.mxu0 %v344
    %499 = vmatmul.mubr.bf16.gmra.mrb[0].mxu0 %v340
    %v500 = vpop.f32.mrb[0].mxu0
    %v501 = vadd.f32 0.0, %v500
    %v502 = vpop.f32.mrb[0].mxu0
    %v503 = vpop.f32.mrb[0].mxu0
    %v504 = vadd.f32 0.0, %v503
    %v505 = vpop.f32.mrb[0].mxu0
    %506 = vmatprep.mubr.bf16.mxu0 %v352
    %507 = vmatmul.mubr.bf16.gmra.mrb[0].mxu0 %v348
    %v508 = vpop.f32.mrb[0].mxu0
    %v509 = vadd.f32 0.0, %v508
    %v510 = vpop.f32.mrb[0].mxu0
    %v511 = vpop.f32.mrb[0].mxu0
    %v512 = vadd.f32 0.0, %v511
    %v513 = vpop.f32.mrb[0].mxu0
    %514 = vmatprep.mubr.bf16.mxu0 %v360
    %515 = vmatmul.mubr.bf16.gmra.mrb[0].mxu0 %v356
    %v516 = vpop.f32.mrb[0].mxu0
    %v517 = vadd.f32 0.0, %v516
    %v518 = vpop.f32.mrb[0].mxu0
    %v519 = vpop.f32.mrb[0].mxu0
    %v520 = vadd.f32 0.0, %v519
    %v521 = vpop.f32.mrb[0].mxu0
    %522 = vdwg.mxu0
    %v523 = vpack.c.bf16 %v493, %v493
    %v524 = vpack.c.bf16 %v496, %v496
    %v525 = vpack.c.bf16 %v501, %v501
    %v526 = vpack.c.bf16 %v504, %v504
    %v527 = vpack.c.bf16 %v509, %v509
    %v528 = vpack.c.bf16 %v512, %v512
    %v529 = vpack.c.bf16 %v517, %v517
    %v530 = vpack.c.bf16 %v520, %v520
    %531 = vst [vmem:[#allocation5] sm:$0xf] %v523
    %532 = vst [vmem:[#allocation5 + $0x4] sm:$0xf] %v524
    %533 = vst [vmem:[#allocation5 + $0x8] sm:$0xf] %v525
    %534 = vst [vmem:[#allocation5 + $0xc] sm:$0xf] %v526
    %535 = vst [vmem:[#allocation5 + $0x10] sm:$0xf] %v527
    %536 = vst [vmem:[#allocation5 + $0x14] sm:$0xf] %v528
    %537 = vst [vmem:[#allocation5 + $0x18] sm:$0xf] %v529
    %538 = vst [vmem:[#allocation5 + $0x1c] sm:$0xf] %v530
    %539 = vst [vmem:[#allocation6] sm:$0xff] %v306
    %540 = vst [vmem:[#allocation8] sm:$0xff] %v310
    // Predicated region
    $region38: #{tpu_custom_call.1} parent=1 // pred_check
      _
    $region39: #{tpu_custom_call.1} parent=1 // pred_check_branch
      %542 = sbr.rel (0) target = $region41
    $region40: #{tpu_custom_call.1} parent=1 // pred_region
      %s544 = ssub.s32 512, 512
      %545 = vsyncadd [#allocation4], %s544
      %s546 = sshll.u32 [#allocation5], 4
      %s547 = int_to_ptr.vmem [resolvable:$true] %s546
      %552 = dma.vmem_to_hbm [thread:$0]  %s547, 512, %s7, [#allocation4], 64, 64, 4
    $region41: #{tpu_custom_call.1} parent=1 // pred_fallthru
      _
    // Predicated region
    $region42: #{tpu_custom_call.1} parent=1 // pred_check
      _
    $region43: #{tpu_custom_call.1} parent=1 // pred_check_branch
      %554 = sbr.rel (0) target = $region45
    $region44: #{tpu_custom_call.1} parent=1 // pred_region
      %s556 = ssub.s32 128, 128
      %557 = vsyncadd [#allocation7], %s556
      %s559 = sshll.u32 [#allocation6], 4
      %s560 = int_to_ptr.vmem [resolvable:$true] %s559
      %562 = dma.vmem_to_hbm [thread:$0]  %s560, 128, %s8, [#allocation7]
    $region45: #{tpu_custom_call.1} parent=1 // pred_fallthru
      _
    // Predicated region
    $region46: #{tpu_custom_call.1} parent=1 // pred_check
      _
    $region47: #{tpu_custom_call.1} parent=1 // pred_check_branch
      %564 = sbr.rel (0) target = $region49
    $region48: #{tpu_custom_call.1} parent=1 // pred_region
      %s566 = ssub.s32 128, 128
      %567 = vsyncadd [#allocation7], %s566
      %s569 = sshll.u32 [#allocation8], 4
      %s570 = int_to_ptr.vmem [resolvable:$true] %s569
      %572 = dma.vmem_to_hbm [thread:$0]  %s570, 128, %s9, [#allocation7]
    $region49: #{tpu_custom_call.1} parent=1 // pred_fallthru
      _
    // Predicated region
    $region50: #{tpu_custom_call.1} parent=1 // pred_check
      _
    $region51: #{tpu_custom_call.1} parent=1 // pred_check_branch
      %574 = sbr.rel (0) target = $region53
    $region52: #{tpu_custom_call.1} parent=1 // pred_region
      %575 = dma.done [#allocation4], 512
    $region53: #{tpu_custom_call.1} parent=1 // pred_fallthru
      _
    // Predicated region
    $region54: #{tpu_custom_call.1} parent=1 // pred_check
      _
    $region55: #{tpu_custom_call.1} parent=1 // pred_check_branch
      %577 = sbr.rel (0) target = $region57
    $region56: #{tpu_custom_call.1} parent=1 // pred_region
      %578 = dma.done [#allocation7], 128
    $region57: #{tpu_custom_call.1} parent=1 // pred_fallthru
      _
    // Predicated region
    $region58: #{tpu_custom_call.1} parent=1 // pred_check
      _
    $region59: #{tpu_custom_call.1} parent=1 // pred_check_branch
      %580 = sbr.rel (0) target = $region61
    $region60: #{tpu_custom_call.1} parent=1 // pred_region
      %581 = dma.done [#allocation7], 128
    $region61: #{tpu_custom_call.1} parent=1 // pred_fallthru
      _
    %582 = vsyncpa [#allocation3], 1
    %583 = vsyncpa [#allocation4], 1
    %584 = vsyncpa [#allocation7], 1

</llo_original>
